<compile_context>
chip_gen: v7x
topology: tpu7x:2x2x1
jax: 0.10.0
libtpu: 0.0.40
codegen_flags: <defaults>
</compile_context>

<pallas_src>
import functools
import numpy as np
import jax
import jax.numpy as jnp
from jax.experimental import pallas as pl
from jax.experimental.pallas import tpu as pltpu


# ----------------------------- coefficient setup (static glue) ----------------

def _hamming_window(window_size):
    # torch.hamming_window(W) default (periodic): 0.54 - 0.46*cos(2*pi*n/W)
    n = np.arange(window_size, dtype=np.float64)
    return 0.54 - 0.46 * np.cos(2.0 * np.pi * n / window_size)


def _build_coefficient_matrices(T, window_size):
    """Build the two static coefficient matrices (float32):

      fwd : (2*Fp, T)  stacked, sublane-padded forward rfft   [Cr ; Ci]
      inv : (T, 2*Fp)  smoothing-folded inverse rfft          [S@Br | S@Bi]

    where F = T//2+1, Fp = F rounded up to a multiple of 8, and S is the
    (flip-pad + Hamming sliding-window average) operator of the PyTorch module.
    """
    F = T // 2 + 1
    Fp = ((F + 7) // 8) * 8

    # real/imag rfft and Hermitian irfft matrices (float64 for accuracy)
    t = np.arange(T, dtype=np.float64)
    f = np.arange(F, dtype=np.float64)
    ang = 2.0 * np.pi * np.outer(f, t) / T                    # (F, T)
    Cr = np.cos(ang)                                          # Re{rfft}
    Ci = -np.sin(ang)                                         # Im{rfft}
    w = np.full((F,), 2.0)                                    # Hermitian weights
    w[0] = 1.0
    if T % 2 == 0:
        w[-1] = 1.0
    Br = (w[None, :] * np.cos(ang).T) / T                     # (T, F)
    Bi = (-w[None, :] * np.sin(ang).T) / T                    # (T, F)

    # smoothing operator S: flip-pad + Hamming sliding-window average
    win = _hamming_window(window_size)
    half = window_size // 2
    T_pad = T + 2 * half
    P = np.zeros((T_pad, T))
    for p in range(half):                                     # left padding (flipped)
        P[p, half - 1 - p] = 1.0
    for p in range(T):                                        # middle
        P[half + p, p] = 1.0
    for q in range(half):                                     # right padding (flipped)
        P[half + T + q, T - 1 - q] = 1.0
    M = np.zeros((T, T_pad))
    for i in range(T):
        M[i, i:i + window_size] = win
    S = (M @ P) / win.sum()                                   # (T, T)

    fwd = np.zeros((2 * Fp, T), dtype=np.float64)
    fwd[:F] = Cr
    fwd[Fp:Fp + F] = Ci

    inv = np.zeros((T, 2 * Fp), dtype=np.float64)
    inv[:, :F] = S @ Br                                       # fold smoothing in
    inv[:, Fp:Fp + F] = S @ Bi

    return fwd.astype(np.float32), inv.astype(np.float32), F, Fp


# ----------------------------------- kernel ------------------------------------

def _sft_kernel(x_ref, fwd_ref, inv_ref, o_ref, *, k, F, Fp):
    x = x_ref[...]                                                       # (T, Lc)

    # forward rfft as ONE stacked MXU matmul: rows [0:F) real, [Fp:Fp+F) imag
    spec = jnp.dot(fwd_ref[...], x, preferred_element_type=jnp.float32)  # (2Fp, Lc)
    re = spec[:Fp]                                                       # aligned slices
    im = spec[Fp:]

    # top-k spectral filter per lane column; rank by squared magnitude
    mag2 = re * re + im * im
    Lc = mag2.shape[1]
    iota_f = jax.lax.broadcasted_iota(jnp.int32, (Fp, Lc), 0)
    neg_inf = jnp.float32(-jnp.inf)
    work = jnp.where(iota_f < F, mag2, neg_inf)              # never pick padded bins
    mask = jnp.zeros((Fp, Lc), jnp.bool_)
    for _ in range(k):                                       # static unroll, k small
        m = jnp.max(work, axis=0, keepdims=True)             # (1, Lc) XLU reduce
        is_max = work == m
        idx = jnp.min(jnp.where(is_max, iota_f, Fp), axis=0, keepdims=True)
        sel = iota_f == idx                                  # first occurrence only
        mask = jnp.logical_or(mask, sel)
        work = jnp.where(sel, neg_inf, work)

    keep = jnp.concatenate([mask, mask], axis=0)             # (2Fp, Lc)
    filtered = jnp.where(keep, spec, 0.0)

    # inverse rfft + Hamming smoothing folded into ONE MXU matmul
    o_ref[...] = jnp.dot(inv_ref[...], filtered, preferred_element_type=jnp.float32)


# ----------------------------------- wrapper ------------------------------------

def spectral_filter_transform(x, window_size, k, max_lane_chunk=4096):
    B, T, C = x.shape
    F = T // 2 + 1
    assert k <= F, "k must not exceed the number of rfft bins (T//2 + 1)"
    fwd, inv, F, Fp = _build_coefficient_matrices(T, window_size)

    # lane-dense layout: (B, T, C) -> (T, B*C); top-k is per (b, c) column so
    # flattening batch*feature onto lanes is exact.
    L = B * C
    x2 = jnp.transpose(x.astype(jnp.float32), (1, 0, 2)).reshape(T, L)

    # lane-chunk per grid step: big multiple of 128 dividing L if possible
    # (amortizes the ~0.35us/step overhead); otherwise one full-width block.
    chunk = L
    if L % 128 == 0:
        chunk = min(L, max_lane_chunk)
        while L % chunk != 0:
            chunk -= 128
    grid = (L // chunk,)

    kern = functools.partial(_sft_kernel, k=k, F=F, Fp=Fp)
    out2 = pl.pallas_call(
        kern,
        out_shape=jax.ShapeDtypeStruct((T, L), jnp.float32),
        grid_spec=pltpu.PrefetchScalarGridSpec(
            num_scalar_prefetch=0,
            grid=grid,
            in_specs=[
                pl.BlockSpec((T, chunk), lambda j: (0, j)),       # x slab
                pl.BlockSpec((2 * Fp, T), lambda j: (0, 0)),      # stacked forward DFT
                pl.BlockSpec((T, 2 * Fp), lambda j: (0, 0)),      # smoothing-folded inverse
            ],
            out_specs=pl.BlockSpec((T, chunk), lambda j: (0, j)),
        ),
        compiler_params=pltpu.CompilerParams(
            dimension_semantics=("parallel",),
            vmem_limit_bytes=32 << 20,   # safe on v5e/v6e (128 MiB) and v7x (64 MiB)
        ),
    )(x2, jnp.asarray(fwd), jnp.asarray(inv))

    # back to (B, T, C)
    return out2.reshape(T, B, C).transpose(1, 0, 2)


# ------------------------------ pure-JAX reference ------------------------------

def _reference(x, window_size, k):
    x = x.astype(jnp.float32)
    B, T, C = x.shape
    F = T // 2 + 1
    Xf = jnp.fft.rfft(x, axis=1)                                   # (B, F, C) complex
    mag = jnp.abs(Xf)
    _, idx = jax.lax.top_k(jnp.moveaxis(mag, 1, 2), k)             # (B, C, k)
    mask = jnp.sum(jax.nn.one_hot(idx, F, dtype=jnp.float32), axis=2)   # (B, C, F)
    mask = jnp.moveaxis(mask, 2, 1)                                # (B, F, C)
    xf = jnp.fft.irfft(Xf * mask, n=T, axis=1).astype(jnp.float32)
    win = jnp.asarray(_hamming_window(window_size), dtype=jnp.float32)
    half = window_size // 2
    left = xf[:, :half, :][:, ::-1, :]
    right = xf[:, -half:, :][:, ::-1, :]
    padded = jnp.concatenate([left, xf, right], axis=1)
    rows = []
    for i in range(T):
        wd = padded[:, i:i + window_size, :]
        rows.append(jnp.sum(wd * win[None, :, None], axis=1) / jnp.sum(win))
    return jnp.stack(rows, axis=1)


# ------------------------------------- main -------------------------------------

if __name__ == "__main__":
    B, T, C = 2, 16, 8
    window_size, k = 4, 3

    key = jax.random.PRNGKey(0)
    x = jax.random.normal(key, (B, T, C), dtype=jnp.float32)

    out = spectral_filter_transform(x, window_size, k)
    out = jax.block_until_ready(out)
    assert out.shape == (B, T, C)

    ref = jax.block_until_ready(_reference(x, window_size, k))
    np.testing.assert_allclose(np.asarray(out), np.asarray(ref), atol=1e-3, rtol=1e-3)

    print("KERNEL_OK")
</pallas_src>

<mosaic_0001>
module attributes {stable_mosaic.version = 11 : i64} {
  func.func @_sft_kernel(%arg0: i32, %arg1: memref<16x16xf32, #tpu.memory_space<vmem>>, %arg2: memref<32x16xf32, #tpu.memory_space<vmem>>, %arg3: memref<16x32xf32, #tpu.memory_space<vmem>>, %arg4: memref<16x16xf32, #tpu.memory_space<vmem>>) attributes {dimension_semantics = [#tpu.dimension_semantics<parallel>], iteration_bounds = array<i64: 1>, scalar_prefetch = 0 : i64, scratch_operands = 0 : i64, tpu.core_type = #tpu.core_type<tc>, window_params = [{transform_indices = @transform_0, window_bounds = array<i64: 16, 16>}, {pipeline_mode = #tpu.pipeline_mode<synchronous>, transform_indices = @transform_1, window_bounds = array<i64: 32, 16>}, {pipeline_mode = #tpu.pipeline_mode<synchronous>, transform_indices = @transform_2, window_bounds = array<i64: 16, 32>}, {transform_indices = @transform_3, window_bounds = array<i64: 16, 16>}]} {
    %c0 = arith.constant 0 : index
    %c0_0 = arith.constant 0 : index
    %0 = vector.load %arg1[%c0, %c0_0] : memref<16x16xf32, #tpu.memory_space<vmem>>, vector<16x16xf32>
    %c0_1 = arith.constant 0 : index
    %c0_2 = arith.constant 0 : index
    %1 = vector.load %arg2[%c0_1, %c0_2] : memref<32x16xf32, #tpu.memory_space<vmem>>, vector<32x16xf32>
    %cst = arith.constant dense<0.000000e+00> : vector<32x16xf32>
    %2 = tpu.matmul %1, %0, %cst {dimension_numbers = #tpu.dot_dimension_numbers<[1], [0], [0], [1], [0, 0, 1, 1], [], []>} : vector<32x16xf32>, vector<16x16xf32>, vector<32x16xf32> -> vector<32x16xf32>
    %3 = vector.extract_strided_slice %2 {offsets = [0, 0], sizes = [16, 16], strides = [1, 1]} : vector<32x16xf32> to vector<16x16xf32>
    %4 = vector.extract_strided_slice %2 {offsets = [16, 0], sizes = [16, 16], strides = [1, 1]} : vector<32x16xf32> to vector<16x16xf32>
    %5 = arith.mulf %3, %3 : vector<16x16xf32>
    %6 = arith.mulf %4, %4 : vector<16x16xf32>
    %7 = arith.addf %5, %6 : vector<16x16xf32>
    %8 = tpu.iota {dimensions = array<i32: 0>} : vector<16x16xi32>
    %c9_i32 = arith.constant 9 : i32
    %9 = vector.broadcast %c9_i32 : i32 to vector<16x16xi32>
    %10 = arith.cmpi slt, %8, %9 : vector<16x16xi32>
    %cst_3 = arith.constant 0xFF800000 : f32
    %11 = vector.broadcast %cst_3 : f32 to vector<16x16xf32>
    %12 = arith.select %10, %7, %11 : vector<16x16xi1>, vector<16x16xf32>
    %false = arith.constant false
    %13 = vector.broadcast %false : i1 to vector<16x16xi1>
    %cst_4 = arith.constant dense<0xFF800000> : vector<16xf32>
    %14 = vector.multi_reduction <maximumf>, %12, %cst_4 [0] : vector<16x16xf32> to vector<16xf32>
    %15 = vector.shape_cast %14 : vector<16xf32> to vector<1x16xf32>
    %16 = vector.broadcast %15 : vector<1x16xf32> to vector<16x16xf32>
    %17 = arith.cmpf oeq, %12, %16 : vector<16x16xf32>
    %c16_i32 = arith.constant 16 : i32
    %18 = vector.broadcast %c16_i32 : i32 to vector<16x16xi32>
    %19 = arith.select %17, %8, %18 : vector<16x16xi1>, vector<16x16xi32>
    %cst_5 = arith.constant dense<2147483647> : vector<16xi32>
    %20 = vector.multi_reduction <minsi>, %19, %cst_5 [0] : vector<16x16xi32> to vector<16xi32>
    %21 = vector.shape_cast %20 : vector<16xi32> to vector<1x16xi32>
    %22 = vector.broadcast %21 : vector<1x16xi32> to vector<16x16xi32>
    %23 = arith.cmpi eq, %8, %22 : vector<16x16xi32>
    %24 = arith.ori %13, %23 : vector<16x16xi1>
    %cst_6 = arith.constant 0xFF800000 : f32
    %25 = vector.broadcast %cst_6 : f32 to vector<16x16xf32>
    %26 = arith.select %23, %25, %12 : vector<16x16xi1>, vector<16x16xf32>
    %cst_7 = arith.constant dense<0xFF800000> : vector<16xf32>
    %27 = vector.multi_reduction <maximumf>, %26, %cst_7 [0] : vector<16x16xf32> to vector<16xf32>
    %28 = vector.shape_cast %27 : vector<16xf32> to vector<1x16xf32>
    %29 = vector.broadcast %28 : vector<1x16xf32> to vector<16x16xf32>
    %30 = arith.cmpf oeq, %26, %29 : vector<16x16xf32>
    %c16_i32_8 = arith.constant 16 : i32
    %31 = vector.broadcast %c16_i32_8 : i32 to vector<16x16xi32>
    %32 = arith.select %30, %8, %31 : vector<16x16xi1>, vector<16x16xi32>
    %cst_9 = arith.constant dense<2147483647> : vector<16xi32>
    %33 = vector.multi_reduction <minsi>, %32, %cst_9 [0] : vector<16x16xi32> to vector<16xi32>
    %34 = vector.shape_cast %33 : vector<16xi32> to vector<1x16xi32>
    %35 = vector.broadcast %34 : vector<1x16xi32> to vector<16x16xi32>
    %36 = arith.cmpi eq, %8, %35 : vector<16x16xi32>
    %37 = arith.ori %24, %36 : vector<16x16xi1>
    %cst_10 = arith.constant 0xFF800000 : f32
    %38 = vector.broadcast %cst_10 : f32 to vector<16x16xf32>
    %39 = arith.select %36, %38, %26 : vector<16x16xi1>, vector<16x16xf32>
    %cst_11 = arith.constant dense<0xFF800000> : vector<16xf32>
    %40 = vector.multi_reduction <maximumf>, %39, %cst_11 [0] : vector<16x16xf32> to vector<16xf32>
    %41 = vector.shape_cast %40 : vector<16xf32> to vector<1x16xf32>
    %42 = vector.broadcast %41 : vector<1x16xf32> to vector<16x16xf32>
    %43 = arith.cmpf oeq, %39, %42 : vector<16x16xf32>
    %c16_i32_12 = arith.constant 16 : i32
    %44 = vector.broadcast %c16_i32_12 : i32 to vector<16x16xi32>
    %45 = arith.select %43, %8, %44 : vector<16x16xi1>, vector<16x16xi32>
    %cst_13 = arith.constant dense<2147483647> : vector<16xi32>
    %46 = vector.multi_reduction <minsi>, %45, %cst_13 [0] : vector<16x16xi32> to vector<16xi32>
    %47 = vector.shape_cast %46 : vector<16xi32> to vector<1x16xi32>
    %48 = vector.broadcast %47 : vector<1x16xi32> to vector<16x16xi32>
    %49 = arith.cmpi eq, %8, %48 : vector<16x16xi32>
    %50 = arith.ori %37, %49 : vector<16x16xi1>
    %51 = tpu.concatenate %50, %50 in 0 : vector<16x16xi1>, vector<16x16xi1> -> vector<32x16xi1>
    %cst_14 = arith.constant 0.000000e+00 : f32
    %52 = vector.broadcast %cst_14 : f32 to vector<32x16xf32>
    %53 = arith.select %51, %2, %52 : vector<32x16xi1>, vector<32x16xf32>
    %c0_15 = arith.constant 0 : index
    %c0_16 = arith.constant 0 : index
    %54 = vector.load %arg3[%c0_15, %c0_16] : memref<16x32xf32, #tpu.memory_space<vmem>>, vector<16x32xf32>
    %cst_17 = arith.constant dense<0.000000e+00> : vector<16x16xf32>
    %55 = tpu.matmul %54, %53, %cst_17 {dimension_numbers = #tpu.dot_dimension_numbers<[1], [0], [0], [1], [0, 0, 1, 1], [], []>} : vector<16x32xf32>, vector<32x16xf32>, vector<16x16xf32> -> vector<16x16xf32>
    %c0_18 = arith.constant 0 : index
    %c0_19 = arith.constant 0 : index
    %56 = vector.load %arg4[%c0_18, %c0_19] : memref<16x16xf32, #tpu.memory_space<vmem>>, vector<16x16xf32>
    tpu.vector_store %arg4[%c0_18, %c0_19], %55 {strides = array<i32>} : memref<16x16xf32, #tpu.memory_space<vmem>>, vector<16x16xf32>,
    return
  }
  func.func @transform_0(%arg0: i32) -> (i32, i32) {
    %c0_i32 = arith.constant 0 : i32
    %c0_i32_0 = arith.constant 0 : i32
    return %c0_i32, %arg0 : i32, i32
  }
  func.func @transform_1(%arg0: i32) -> (i32, i32) {
    %c0_i32 = arith.constant 0 : i32
    %c0_i32_0 = arith.constant 0 : i32
    %c0_i32_1 = arith.constant 0 : i32
    return %c0_i32, %c0_i32_0 : i32, i32
  }
  func.func @transform_2(%arg0: i32) -> (i32, i32) {
    %c0_i32 = arith.constant 0 : i32
    %c0_i32_0 = arith.constant 0 : i32
    %c0_i32_1 = arith.constant 0 : i32
    return %c0_i32, %c0_i32_0 : i32, i32
  }
  func.func @transform_3(%arg0: i32) -> (i32, i32) {
    %c0_i32 = arith.constant 0 : i32
    %c0_i32_0 = arith.constant 0 : i32
    return %c0_i32, %arg0 : i32, i32
  }
}

</mosaic_0001>

<llo_original>
// kernel: tpu_custom_call.1
$region0: #{tpu_custom_call.1}
  #allocation0 [shape = 'u32[]', space=smem, size = 0x4, offset = 0x4, fixed_abs, tag = 'smem constant byte address 0x4 - core index']
  #allocation1 [shape = 'u32[144,128]{1,0:T(1,128)}', space=vmem, size = 0x12000, scoped, tag = 'internal scratch']
  %s0 = inlined_call_operand.vmem [shape: f32[16,16], index: 0, kind: input, shape index: {}]
  %s1 = inlined_call_operand.vmem [shape: f32[32,16], index: 1, kind: input, shape index: {}]
  %s2 = inlined_call_operand.vmem [shape: f32[16,32], index: 2, kind: input, shape index: {}]
  %s3 = inlined_call_operand.hbm [shape: f32[16,16], index: 3, kind: output, shape index: {}]
  %s4 = sld [smem:[#allocation0]]
  $region22: #{tpu_custom_call.1} parent=0
    _
  %s6 = ssub.s32 1, %s4
  %s7 = scalar_select 0, %s6, %s4
  $region1: #{tpu_custom_call.1} parent=0
    #allocation2 [shape = 'u8[8192]{0}', space=vmem, size = 0x2000, scoped, tag = 'output window, operand 0, single buffered']
    #allocation3 [shape = 's32[1]{0}', space=sflag, size = 0x4, scoped, tag = 'scoped memory for tpu_custom_call.1']
    %8 = vsyncpa [#allocation3], 0
    // Predicated region
    $region2: #{tpu_custom_call.1} parent=1 // pred_check
      _
    $region3: #{tpu_custom_call.1} parent=1 // pred_check_branch
      %10 = sbr.rel (0) target = $region5
    $region4: #{tpu_custom_call.1} parent=1 // pred_region
      _
    $region5: #{tpu_custom_call.1} parent=1 // pred_fallthru
      _
    // Predicated region
    $region6: #{tpu_custom_call.1} parent=1 // pred_check
      _
    $region7: #{tpu_custom_call.1} parent=1 // pred_check_branch
      %12 = sbr.rel (0) target = $region9
    $region8: #{tpu_custom_call.1} parent=1 // pred_region
      _
    $region9: #{tpu_custom_call.1} parent=1 // pred_fallthru
      _
    // Predicated region
    $region10: #{tpu_custom_call.1} parent=1 // pred_check
      _
    $region11: #{tpu_custom_call.1} parent=1 // pred_check_branch
      %14 = sbr.rel (0) target = $region13
    $region12: #{tpu_custom_call.1} parent=1 // pred_region
      _
    $region13: #{tpu_custom_call.1} parent=1 // pred_fallthru
      _
    %v15 = vld [vmem:[%s0] sm:$0xff]
    %v16 = vld [vmem:[%s0 + $0x8] sm:$0xff]
    %v17 = vld [vmem:[%s1] sm:$0xff]
    %v18 = vld [vmem:[%s1 + $0x8] sm:$0xff]
    %v19 = vld [vmem:[%s1 + $0x10] sm:$0xff]
    %v20 = vld [vmem:[%s1 + $0x18] sm:$0xff]
    %vm21 = vcmask 130048
    %v23 = vsel %vm21, %v17, 0
    %v26 = vsel %vm21, %v18, 0
    %v29 = vsel %vm21, %v19, 0
    %v32 = vsel %vm21, %v20, 0
    %34 = vmatprep.subr.mxu0 0.0
    %35 = vmatpush1.msra.mxu0 %v15
    %36 = vmatprep.subr.mxu0 0.0
    %37 = vmatpush1.msra.mxu0 %v16
    %38 = vmatprep.subr.mxu0 0.0
    %39 = vmatpush1.msra.mxu0 0.0
    %40 = vmatprep.subr.mxu0 0.0
    %41 = vmatpush1.msra.mxu0 0.0
    %42 = vmatprep.subr.mxu0 0.0
    %43 = vmatpush1.msra.mxu0 0.0
    %44 = vmatprep.subr.mxu0 0.0
    %45 = vmatpush1.msra.mxu0 0.0
    %46 = vmatprep.subr.mxu0 0.0
    %47 = vmatpush1.msra.mxu0 0.0
    %48 = vmatprep.subr.mxu0 0.0
    %49 = vmatpush1.msra.mxu0 0.0
    %50 = vmatprep.subr.mxu0 0.0
    %51 = vmatpush1.msra.mxu0 0.0
    %52 = vmatprep.subr.mxu0 0.0
    %53 = vmatpush1.msra.mxu0 0.0
    %54 = vmatprep.subr.mxu0 0.0
    %55 = vmatpush1.msra.mxu0 0.0
    %56 = vmatprep.subr.mxu0 0.0
    %57 = vmatpush1.msra.mxu0 0.0
    %58 = vmatprep.subr.mxu0 0.0
    %59 = vmatpush1.msra.mxu0 0.0
    %60 = vmatprep.subr.mxu0 0.0
    %61 = vmatpush1.msra.mxu0 0.0
    %62 = vmatprep.subr.mxu0 0.0
    %63 = vmatpush1.msra.mxu0 0.0
    %64 = vmatprep.subr.mxu0 0.0
    %65 = vmatpush1.msra.mxu0 0.0
    %66 = vmatprep.subr.mxu0 0.0
    %67 = vmatpush1.msra.mxu0 0.0
    %68 = vmatprep.subr.mxu0 0.0
    %69 = vmatpush1.msra.mxu0 0.0
    %70 = vmatprep.subr.mxu0 0.0
    %71 = vmatpush1.msra.mxu0 0.0
    %72 = vmatprep.subr.mxu0 0.0
    %73 = vmatpush1.msra.mxu0 0.0
    %74 = vmatprep.subr.mxu0 0.0
    %75 = vmatpush1.msra.mxu0 0.0
    %76 = vmatprep.subr.mxu0 0.0
    %77 = vmatpush1.msra.mxu0 0.0
    %78 = vmatprep.subr.mxu0 0.0
    %79 = vmatpush1.msra.mxu0 0.0
    %80 = vmatprep.subr.mxu0 0.0
    %81 = vmatpush1.msra.mxu0 0.0
    %82 = vmatprep.subr.mxu0 0.0
    %83 = vmatpush1.msra.mxu0 0.0
    %84 = vmatprep.subr.mxu0 0.0
    %85 = vmatpush1.msra.mxu0 0.0
    %86 = vmatprep.subr.mxu0 0.0
    %87 = vmatpush1.msra.mxu0 0.0
    %88 = vmatprep.subr.mxu0 0.0
    %89 = vmatpush1.msra.mxu0 0.0
    %90 = vmatprep.subr.mxu0 0.0
    %91 = vmatpush1.msra.mxu0 0.0
    %92 = vmatprep.subr.mxu0 0.0
    %93 = vmatpush1.msra.mxu0 0.0
    %94 = vmatprep.subr.mxu0 0.0
    %95 = vmatpush1.msra.mxu0 0.0
    %96 = vmatprep.subr.mxu0 0.0
    %97 = vmatpush1.msra.mxu0 0.0
    %98 = vmatprep.mubr.f32.mxu0 0.0
    %99 = vmatmul.mubr.f32.gmra.mrb[0].mxu0 %v23
    %v100 = vpop.f32.mrb[0].mxu0
    %v101 = vadd.f32 0.0, %v100
    %v102 = vpop.f32.mrb[0].mxu0
    %103 = vmatprep.mubr.f32.mxu0 0.0
    %104 = vmatmul.mubr.f32.gmra.mrb[0].mxu0 %v26
    %v105 = vpop.f32.mrb[0].mxu0
    %v106 = vadd.f32 0.0, %v105
    %v107 = vpop.f32.mrb[0].mxu0
    %108 = vmatprep.mubr.f32.mxu0 0.0
    %109 = vmatmul.mubr.f32.gmra.mrb[0].mxu0 %v29
    %v110 = vpop.f32.mrb[0].mxu0
    %v111 = vadd.f32 0.0, %v110
    %v112 = vpop.f32.mrb[0].mxu0
    %113 = vmatprep.mubr.f32.mxu0 0.0
    %114 = vmatmul.mubr.f32.gmra.mrb[0].mxu0 %v32
    %v115 = vpop.f32.mrb[0].mxu0
    %v116 = vadd.f32 0.0, %v115
    %v117 = vpop.f32.mrb[0].mxu0
    %118 = vdwg.mxu0
    %v119 = vmul.f32 %v101, %v101
    %v120 = vmul.f32 %v106, %v106
    %v121 = vmul.f32 %v111, %v111
    %v122 = vmul.f32 %v116, %v116
    %v123 = vadd.f32 %v119, %v121
    %v124 = vadd.f32 %v120, %v122
    %v125 = vlaneseq
    %v126 = vshrl.u32 %v125, 7
    %v127 = vadd.s32 %v126, 8
    %vm128 = vcmp.lt.s32.totalorder %v126, 9
    %vm129 = vcmp.lt.s32.totalorder %v127, 9
    %v130 = vsel %vm128, %v123, -inf
    %v131 = vsel %vm129, %v124, -inf
    %v132 = vsel %vm21, %v130, -inf
    %v133 = vsel %vm21, %v131, -inf
    %v134 = vmax.f32 %v132, %v133
    %v135 = vrot.slane %v134, 4
    %v136 = vmax.f32 %v134, %v135
    %v137 = vrot.slane %v136, 2
    %v138 = vmax.f32 %v136, %v137
    %v139 = vrot.slane %v138, 1
    %v140 = vmax.f32 %v138, %v139
    %vm141 = vcmp.eq.f32.partialorder %v130, %v140
    %vm142 = vcmp.eq.f32.partialorder %v131, %v140
    %v143 = vsel %vm141, %v126, 16
    %v144 = vsel %vm142, %v127, 16
    %v145 = vsel %vm21, %v143, 2147483647
    %v146 = vsel %vm21, %v144, 2147483647
    %vm147 = vcmp.lt.s32.totalorder %v145, %v146
    %v148 = vsel %vm147, %v145, %v146
    %v149 = vrot.slane %v148, 4
    %vm150 = vcmp.lt.s32.totalorder %v148, %v149
    %v151 = vsel %vm150, %v148, %v149
    %v152 = vrot.slane %v151, 2
    %vm153 = vcmp.lt.s32.totalorder %v151, %v152
    %v154 = vsel %vm153, %v151, %v152
    %v155 = vrot.slane %v154, 1
    %vm156 = vcmp.lt.s32.totalorder %v154, %v155
    %v157 = vsel %vm156, %v154, %v155
    %vm158 = vcmp.eq.s32.totalorder %v126, %v157
    %vm159 = vcmp.eq.s32.totalorder %v127, %v157
    %v160 = vsel %vm158, -inf, %v130
    %v161 = vsel %vm159, -inf, %v131
    %v162 = vsel %vm21, %v160, -inf
    %v163 = vsel %vm21, %v161, -inf
    %v164 = vmax.f32 %v162, %v163
    %v165 = vrot.slane %v164, 4
    %v166 = vmax.f32 %v164, %v165
    %v167 = vrot.slane %v166, 2
    %v168 = vmax.f32 %v166, %v167
    %v169 = vrot.slane %v168, 1
    %v170 = vmax.f32 %v168, %v169
    %vm171 = vcmp.eq.f32.partialorder %v160, %v170
    %vm172 = vcmp.eq.f32.partialorder %v161, %v170
    %v173 = vsel %vm171, %v126, 16
    %v174 = vsel %vm172, %v127, 16
    %v175 = vsel %vm21, %v173, 2147483647
    %v176 = vsel %vm21, %v174, 2147483647
    %vm177 = vcmp.lt.s32.totalorder %v175, %v176
    %v178 = vsel %vm177, %v175, %v176
    %v179 = vrot.slane %v178, 4
    %vm180 = vcmp.lt.s32.totalorder %v178, %v179
    %v181 = vsel %vm180, %v178, %v179
    %v182 = vrot.slane %v181, 2
    %vm183 = vcmp.lt.s32.totalorder %v181, %v182
    %v184 = vsel %vm183, %v181, %v182
    %v185 = vrot.slane %v184, 1
    %vm186 = vcmp.lt.s32.totalorder %v184, %v185
    %v187 = vsel %vm186, %v184, %v185
    %vm188 = vcmp.eq.s32.totalorder %v126, %v187
    %vm189 = vcmp.eq.s32.totalorder %v127, %v187
    %vm190 = vmor %vm158, %vm188
    %vm191 = vmor %vm159, %vm189
    %v192 = vsel %vm188, -inf, %v160
    %v193 = vsel %vm189, -inf, %v161
    %v194 = vsel %vm21, %v192, -inf
    %v195 = vsel %vm21, %v193, -inf
    %v196 = vmax.f32 %v194, %v195
    %v197 = vrot.slane %v196, 4
    %v198 = vmax.f32 %v196, %v197
    %v199 = vrot.slane %v198, 2
    %v200 = vmax.f32 %v198, %v199
    %v201 = vrot.slane %v200, 1
    %v202 = vmax.f32 %v200, %v201
    %vm203 = vcmp.eq.f32.partialorder %v192, %v202
    %vm204 = vcmp.eq.f32.partialorder %v193, %v202
    %v205 = vsel %vm203, %v126, 16
    %v206 = vsel %vm204, %v127, 16
    %v207 = vsel %vm21, %v205, 2147483647
    %v208 = vsel %vm21, %v206, 2147483647
    %vm209 = vcmp.lt.s32.totalorder %v207, %v208
    %v210 = vsel %vm209, %v207, %v208
    %v211 = vrot.slane %v210, 4
    %vm212 = vcmp.lt.s32.totalorder %v210, %v211
    %v213 = vsel %vm212, %v210, %v211
    %v214 = vrot.slane %v213, 2
    %vm215 = vcmp.lt.s32.totalorder %v213, %v214
    %v216 = vsel %vm215, %v213, %v214
    %v217 = vrot.slane %v216, 1
    %vm218 = vcmp.lt.s32.totalorder %v216, %v217
    %v219 = vsel %vm218, %v216, %v217
    %vm220 = vcmp.eq.s32.totalorder %v126, %v219
    %vm221 = vcmp.eq.s32.totalorder %v127, %v219
    %vm222 = vmor %vm190, %vm220
    %vm223 = vmor %vm191, %vm221
    %v224 = vsel %vm222, %v101, 0.0
    %v225 = vsel %vm223, %v106, 0.0
    %v226 = vsel %vm222, %v111, 0.0
    %v227 = vsel %vm223, %v116, 0.0
    %v228 = vld [vmem:[%s2] sm:$0xff]
    %v229 = vld [vmem:[%s2 + $0x8] sm:$0xff]
    %vm230 = vcmask 261120
    %v232 = vsel %vm230, %v228, 0
    %v235 = vsel %vm230, %v229, 0
    %237 = vmatprep.subr.mxu0 0.0
    %238 = vmatpush1.msra.mxu0 %v224
    %239 = vmatprep.subr.mxu0 0.0
    %240 = vmatpush1.msra.mxu0 %v225
    %241 = vmatprep.subr.mxu0 0.0
    %242 = vmatpush1.msra.mxu0 %v226
    %243 = vmatprep.subr.mxu0 0.0
    %244 = vmatpush1.msra.mxu0 %v227
    %245 = vmatprep.subr.mxu0 0.0
    %246 = vmatpush1.msra.mxu0 0.0
    %247 = vmatprep.subr.mxu0 0.0
    %248 = vmatpush1.msra.mxu0 0.0
    %249 = vmatprep.subr.mxu0 0.0
    %250 = vmatpush1.msra.mxu0 0.0
    %251 = vmatprep.subr.mxu0 0.0
    %252 = vmatpush1.msra.mxu0 0.0
    %253 = vmatprep.subr.mxu0 0.0
    %254 = vmatpush1.msra.mxu0 0.0
    %255 = vmatprep.subr.mxu0 0.0
    %256 = vmatpush1.msra.mxu0 0.0
    %257 = vmatprep.subr.mxu0 0.0
    %258 = vmatpush1.msra.mxu0 0.0
    %259 = vmatprep.subr.mxu0 0.0
    %260 = vmatpush1.msra.mxu0 0.0
    %261 = vmatprep.subr.mxu0 0.0
    %262 = vmatpush1.msra.mxu0 0.0
    %263 = vmatprep.subr.mxu0 0.0
    %264 = vmatpush1.msra.mxu0 0.0
    %265 = vmatprep.subr.mxu0 0.0
    %266 = vmatpush1.msra.mxu0 0.0
    %267 = vmatprep.subr.mxu0 0.0
    %268 = vmatpush1.msra.mxu0 0.0
    %269 = vmatprep.subr.mxu0 0.0
    %270 = vmatpush1.msra.mxu0 0.0
    %271 = vmatprep.subr.mxu0 0.0
    %272 = vmatpush1.msra.mxu0 0.0
    %273 = vmatprep.subr.mxu0 0.0
    %274 = vmatpush1.msra.mxu0 0.0
    %275 = vmatprep.subr.mxu0 0.0
    %276 = vmatpush1.msra.mxu0 0.0
    %277 = vmatprep.subr.mxu0 0.0
    %278 = vmatpush1.msra.mxu0 0.0
    %279 = vmatprep.subr.mxu0 0.0
    %280 = vmatpush1.msra.mxu0 0.0
    %281 = vmatprep.subr.mxu0 0.0
    %282 = vmatpush1.msra.mxu0 0.0
    %283 = vmatprep.subr.mxu0 0.0
    %284 = vmatpush1.msra.mxu0 0.0
    %285 = vmatprep.subr.mxu0 0.0
    %286 = vmatpush1.msra.mxu0 0.0
    %287 = vmatprep.subr.mxu0 0.0
    %288 = vmatpush1.msra.mxu0 0.0
    %289 = vmatprep.subr.mxu0 0.0
    %290 = vmatpush1.msra.mxu0 0.0
    %291 = vmatprep.subr.mxu0 0.0
    %292 = vmatpush1.msra.mxu0 0.0
    %293 = vmatprep.subr.mxu0 0.0
    %294 = vmatpush1.msra.mxu0 0.0
    %295 = vmatprep.subr.mxu0 0.0
    %296 = vmatpush1.msra.mxu0 0.0
    %297 = vmatprep.subr.mxu0 0.0
    %298 = vmatpush1.msra.mxu0 0.0
    %299 = vmatprep.subr.mxu0 0.0
    %300 = vmatpush1.msra.mxu0 0.0
    %301 = vmatprep.mubr.f32.mxu0 0.0
    %302 = vmatmul.mubr.f32.gmra.mrb[0].mxu0 %v232
    %v303 = vpop.f32.mrb[0].mxu0
    %v304 = vadd.f32 0.0, %v303
    %v305 = vpop.f32.mrb[0].mxu0
    %306 = vmatprep.mubr.f32.mxu0 0.0
    %307 = vmatmul.mubr.f32.gmra.mrb[0].mxu0 %v235
    %v308 = vpop.f32.mrb[0].mxu0
    %v309 = vadd.f32 0.0, %v308
    %v310 = vpop.f32.mrb[0].mxu0
    %311 = vdwg.mxu0
    %312 = vst.msk [vmem:[#allocation2] sm:$0xff] %vm21, %v304
    %313 = vst.msk [vmem:[#allocation2 + $0x8] sm:$0xff] %vm21, %v309
    // Predicated region
    $region14: #{tpu_custom_call.1} parent=1 // pred_check
      _
    $region15: #{tpu_custom_call.1} parent=1 // pred_check_branch
      %315 = sbr.rel (0) target = $region17
    $region16: #{tpu_custom_call.1} parent=1 // pred_region
      %s317 = ssub.s32 256, 256
      %318 = vsyncadd [#allocation3], %s317
      %s319 = sshll.u32 [#allocation2], 4
      %s320 = int_to_ptr.vmem [resolvable:$true] %s319
      %325 = dma.vmem_to_hbm [thread:$0]  %s320, 256, %s3, [#allocation3], 128, 128, 8
    $region17: #{tpu_custom_call.1} parent=1 // pred_fallthru
      _
    // Predicated region
    $region18: #{tpu_custom_call.1} parent=1 // pred_check
      _
    $region19: #{tpu_custom_call.1} parent=1 // pred_check_branch
      %327 = sbr.rel (0) target = $region21
    $region20: #{tpu_custom_call.1} parent=1 // pred_region
      %328 = dma.done [#allocation3], 256
    $region21: #{tpu_custom_call.1} parent=1 // pred_fallthru
      _
    %329 = vsyncpa [#allocation3], 1

</llo_original>
